<compile_context>
chip_gen: v5e
topology: v5e:2x2
jax: 0.10.0
libtpu: 0.0.40
codegen_flags: <defaults>
</compile_context>

<pallas_src>
import functools

import jax
import jax.numpy as jnp
from jax.experimental import pallas as pl
from jax.experimental.pallas import tpu as pltpu


# ---------------------------------------------------------------------------
# Fused tower kernel (one image per grid step)
# ---------------------------------------------------------------------------

def _fused_tower_kernel(x_ref, w3_ref, b3_ref, w1_ref, b1_ref, o_ref, xp_ref,
                        *, H, W, num_convs):
    """Fused [3x3 conv + ReLU] * num_convs + 1x1 conv for one image.

    x_ref : (1, C, H*W)            input image, channels on sublanes, H*W on lanes
    w3_ref: (num_convs, C, 9*C)    packed 3x3 weights, (Cout, tap-major 9*Cin)
    b3_ref: (num_convs, C, 1)      3x3 biases
    w1_ref: (out_ch, C)            packed 1x1 weight
    b1_ref: (out_ch, 1)            1x1 bias
    o_ref : (1, out_ch, H*W)       output
    xp_ref: (C, H*W + 2*(W+1))     VMEM scratch: activation with zero lane halo
    """
    C = x_ref.shape[1]
    HW = H * W
    PAD = W + 1

    # Zero the scratch once per image; the halo regions are never overwritten
    # and provide the SAME-padding zeros (rows above/below) for every layer.
    xp_ref[...] = jnp.zeros_like(xp_ref)

    # Column-validity masks (row validity is handled by the zero halo).
    w_idx = jax.lax.broadcasted_iota(jnp.int32, (C, HW), 1) % W
    mask_l = w_idx >= 1            # tap reads column w-1: invalid at w == 0
    mask_r = w_idx <= (W - 2)      # tap reads column w+1: invalid at w == W-1

    act = x_ref[0].astype(jnp.float32)                        # (C, HW)

    for layer in range(num_convs):
        # Place the current activation in the middle of the haloed buffer.
        xp_ref[:, PAD:PAD + HW] = act

        # im2col: 9 shifted lane slices -> (9*C, HW)
        taps = []
        for oh in (-1, 0, 1):
            for ow in (-1, 0, 1):
                start = PAD + oh * W + ow                     # static offset
                patch = xp_ref[:, start:start + HW]           # (C, HW)
                if ow == -1:
                    patch = jnp.where(mask_l, patch, 0.0)
                elif ow == 1:
                    patch = jnp.where(mask_r, patch, 0.0)
                taps.append(patch)
        patches = jnp.concatenate(taps, axis=0)               # (9*C, HW)

        # Single K = 9*C matmul, lane-dense (C, HW) result.
        y = jnp.dot(w3_ref[layer], patches,
                    preferred_element_type=jnp.float32)       # (C, HW)
        act = jnp.maximum(y + b3_ref[layer], 0.0)             # bias + ReLU

    # Final 1x1 conv (no activation), lane-dense (out_ch, HW) result.
    out = jnp.dot(w1_ref[...], act, preferred_element_type=jnp.float32)
    out = out + b1_ref[...]
    o_ref[0] = out.astype(o_ref.dtype)


def mask_branch_tower(x_nchw, w3_packed, b3_packed, w1_packed, b1_packed):
    """x_nchw: (N,C,H,W); packed weights as produced by MaskBranchPallas."""
    N, C, H, W = x_nchw.shape
    HW = H * W
    PAD = W + 1
    num_convs = w3_packed.shape[0]
    out_ch = w1_packed.shape[0]

    x_flat = x_nchw.reshape(N, C, HW)                         # contiguous, free

    kernel = functools.partial(_fused_tower_kernel, H=H, W=W,
                               num_convs=num_convs)

    y = pl.pallas_call(
        kernel,
        out_shape=jax.ShapeDtypeStruct((N, out_ch, HW), x_nchw.dtype),
        grid=(N,),
        in_specs=[
            pl.BlockSpec((1, C, HW), lambda n: (n, 0, 0)),
            pl.BlockSpec((num_convs, C, 9 * C), lambda n: (0, 0, 0)),
            pl.BlockSpec((num_convs, C, 1), lambda n: (0, 0, 0)),
            pl.BlockSpec((out_ch, C), lambda n: (0, 0)),
            pl.BlockSpec((out_ch, 1), lambda n: (0, 0)),
        ],
        out_specs=pl.BlockSpec((1, out_ch, HW), lambda n: (n, 0, 0)),
        scratch_shapes=[pltpu.VMEM((C, HW + 2 * PAD), jnp.float32)],
        compiler_params=pltpu.CompilerParams(
            dimension_semantics=("parallel",)),
    )(x_flat, w3_packed, b3_packed, w1_packed, b1_packed)

    return y.reshape(N, out_ch, H, W)


# ---------------------------------------------------------------------------
# MaskBranch (norm = "" -> Conv+bias+ReLU blocks, inference path)
# ---------------------------------------------------------------------------

class MaskBranchPallas:
    def __init__(self, key, channels=8, num_convs=2, num_outputs=4):
        self.num_outputs = num_outputs
        out_ch = max(num_outputs, 1)
        keys = jax.random.split(key, num_convs + 1)

        # Deterministic synthetic init (kaiming-uniform in torch; synthetic here).
        self.tower_w_hwio = []     # (3,3,Cin,Cout) per layer  (used by reference)
        self.tower_b = []
        for i in range(num_convs):
            kw, kb = jax.random.split(keys[i])
            self.tower_w_hwio.append(
                0.1 * jax.random.normal(kw, (3, 3, channels, channels), jnp.float32))
            self.tower_b.append(
                0.05 * jax.random.normal(kb, (channels,), jnp.float32))
        kw, kb = jax.random.split(keys[-1])
        self.out_w_io = 0.1 * jax.random.normal(kw, (channels, out_ch), jnp.float32)
        self.out_b = 0.05 * jax.random.normal(kb, (out_ch,), jnp.float32)

        # Pack once for the fused kernel:
        #   3x3: HWIO (kh,kw,ci,co) -> (co, kh,kw,ci) -> (co, 9*ci)  tap-major
        #   1x1: IO (ci,co) -> (co, ci)
        self.w3_packed = jnp.stack(
            [jnp.transpose(w, (3, 0, 1, 2)).reshape(channels, 9 * channels)
             for w in self.tower_w_hwio])                         # (num_convs, C, 9C)
        self.b3_packed = jnp.stack(
            [b.reshape(channels, 1) for b in self.tower_b])       # (num_convs, C, 1)
        self.w1_packed = self.out_w_io.T                          # (out_ch, C)
        self.b1_packed = self.out_b.reshape(out_ch, 1)            # (out_ch, 1)

        # TODO(synk): training-only semantic focal loss (sem_loss_on) and the
        # gt_instances target construction are not implemented (inference forward).
        # The `refine` / aligned_bilinear branch is commented out in the reference
        # forward and therefore omitted as well.

    def __call__(self, features):
        x = features['p3']                                        # NCHW
        mask_feats = mask_branch_tower(x, self.w3_packed, self.b3_packed,
                                       self.w1_packed, self.b1_packed)
        if self.num_outputs == 0:
            mask_feats = mask_feats[:, :self.num_outputs]
        losses = {}
        return mask_feats, losses


# ---------------------------------------------------------------------------
# Pure-JAX reference (independent correctness check via lax.conv)
# ---------------------------------------------------------------------------

def _reference_forward(branch, features):
    x = jnp.transpose(features['p3'], (0, 2, 3, 1))               # NCHW -> NHWC
    dn = ('NHWC', 'HWIO', 'NHWC')
    for w, b in zip(branch.tower_w_hwio, branch.tower_b):
        x = jax.lax.conv_general_dilated(x, w, (1, 1), 'SAME',
                                         dimension_numbers=dn)
        x = jnp.maximum(x + b[None, None, None, :], 0.0)
    x = jax.lax.conv_general_dilated(x, branch.out_w_io[None, None],
                                     (1, 1), 'SAME', dimension_numbers=dn)
    x = x + branch.out_b[None, None, None, :]
    return jnp.transpose(x, (0, 3, 1, 2))                         # NHWC -> NCHW


if __name__ == "__main__":
    key = jax.random.PRNGKey(0)
    k_x, k_p = jax.random.split(key)

    N, C, H, W = 2, 8, 16, 16          # features['p3'], NCHW
    x = jax.random.normal(k_x, (N, C, H, W), jnp.float32)
    features = {'p3': x}

    branch = MaskBranchPallas(k_p, channels=C, num_convs=2, num_outputs=4)

    mask_feats, losses = branch(features)
    mask_feats = jax.block_until_ready(mask_feats)

    ref = _reference_forward(branch, features)
    assert mask_feats.shape == (N, 4, H, W)
    assert jnp.allclose(mask_feats, ref, atol=1e-4, rtol=1e-4), (
        float(jnp.max(jnp.abs(mask_feats - ref))))
    assert losses == {}

    print("KERNEL_OK")
</pallas_src>

<mosaic_0001>
module attributes {stable_mosaic.version = 11 : i64} {
  func.func @_fused_tower_kernel(%arg0: i32, %arg1: memref<1x8x256xf32, #tpu.memory_space<vmem>>, %arg2: memref<2x8x72xf32, #tpu.memory_space<vmem>>, %arg3: memref<2x8x1xf32, #tpu.memory_space<vmem>>, %arg4: memref<4x8xf32, #tpu.memory_space<vmem>>, %arg5: memref<4x1xf32, #tpu.memory_space<vmem>>, %arg6: memref<1x4x256xf32, #tpu.memory_space<vmem>>, %arg7: memref<8x290xf32, #tpu.memory_space<vmem>>) attributes {dimension_semantics = [#tpu.dimension_semantics<parallel>], iteration_bounds = array<i64: 2>, scalar_prefetch = 0 : i64, scratch_operands = 1 : i64, tpu.core_type = #tpu.core_type<tc>, window_params = [{transform_indices = @transform_0, window_bounds = array<i64: 1, 8, 256>}, {pipeline_mode = #tpu.pipeline_mode<synchronous>, transform_indices = @transform_1, window_bounds = array<i64: 2, 8, 72>}, {pipeline_mode = #tpu.pipeline_mode<synchronous>, transform_indices = @transform_2, window_bounds = array<i64: 2, 8, 1>}, {pipeline_mode = #tpu.pipeline_mode<synchronous>, transform_indices = @transform_3, window_bounds = array<i64: 4, 8>}, {pipeline_mode = #tpu.pipeline_mode<synchronous>, transform_indices = @transform_4, window_bounds = array<i64: 4, 1>}, {transform_indices = @transform_5, window_bounds = array<i64: 1, 4, 256>}]} {
    %cst = arith.constant 0.000000e+00 : f32
    %0 = vector.broadcast %cst : f32 to vector<8x290xf32>
    %c0 = arith.constant 0 : index
    %c0_0 = arith.constant 0 : index
    %1 = vector.load %arg7[%c0, %c0_0] : memref<8x290xf32, #tpu.memory_space<vmem>>, vector<8x290xf32>
    tpu.vector_store %arg7[%c0, %c0_0], %0 {strides = array<i32>} : memref<8x290xf32, #tpu.memory_space<vmem>>, vector<8x290xf32>,
    %2 = tpu.iota {dimensions = array<i32: 1>} : vector<8x256xi32>
    %c16_i32 = arith.constant 16 : i32
    %c0_i32 = arith.constant 0 : i32
    %3 = arith.cmpi eq, %c16_i32, %c0_i32 : i32
    %c1_i32 = arith.constant 1 : i32
    %4 = arith.select %3, %c1_i32, %c16_i32 : i32
    %5 = vector.broadcast %4 : i32 to vector<8x256xi32>
    %6 = arith.remsi %2, %5 : vector<8x256xi32>
    %c0_i32_1 = arith.constant 0 : i32
    %7 = vector.broadcast %c0_i32_1 : i32 to vector<8x256xi32>
    %8 = arith.cmpi ne, %6, %7 : vector<8x256xi32>
    %c0_i32_2 = arith.constant 0 : i32
    %9 = vector.broadcast %c0_i32_2 : i32 to vector<8x256xi32>
    %10 = arith.cmpi slt, %6, %9 : vector<8x256xi32>
    %c0_i32_3 = arith.constant 0 : i32
    %11 = arith.cmpi slt, %4, %c0_i32_3 : i32
    %12 = vector.broadcast %11 : i1 to vector<8x256xi1>
    %13 = vector.broadcast %12 : vector<8x256xi1> to vector<8x256xi1>
    %14 = arith.xori %10, %13 : vector<8x256xi1>
    %15 = arith.andi %14, %8 : vector<8x256xi1>
    %16 = vector.broadcast %4 : i32 to vector<8x256xi32>
    %17 = arith.addi %6, %16 : vector<8x256xi32>
    %18 = arith.select %15, %17, %6 : vector<8x256xi1>, vector<8x256xi32>
    %c1_i32_4 = arith.constant 1 : i32
    %19 = vector.broadcast %c1_i32_4 : i32 to vector<8x256xi32>
    %20 = arith.cmpi sge, %18, %19 : vector<8x256xi32>
    %c14_i32 = arith.constant 14 : i32
    %21 = vector.broadcast %c14_i32 : i32 to vector<8x256xi32>
    %22 = arith.cmpi sle, %18, %21 : vector<8x256xi32>
    %c0_5 = arith.constant 0 : index
    %c0_6 = arith.constant 0 : index
    %c0_7 = arith.constant 0 : index
    %23 = vector.load %arg1[%c0_5, %c0_6, %c0_7] : memref<1x8x256xf32, #tpu.memory_space<vmem>>, vector<1x8x256xf32>
    %24 = vector.shape_cast %23 : vector<1x8x256xf32> to vector<8x256xf32>
    %c0_8 = arith.constant 0 : index
    %c17 = arith.constant 17 : index
    %25 = vector.load %arg7[%c0_8, %c17] : memref<8x290xf32, #tpu.memory_space<vmem>>, vector<8x256xf32>
    tpu.vector_store %arg7[%c0_8, %c17], %24 {strides = array<i32>} : memref<8x290xf32, #tpu.memory_space<vmem>>, vector<8x256xf32>,
    %c0_9 = arith.constant 0 : index
    %c0_10 = arith.constant 0 : index
    %26 = vector.load %arg7[%c0_9, %c0_10] : memref<8x290xf32, #tpu.memory_space<vmem>>, vector<8x256xf32>
    %cst_11 = arith.constant 0.000000e+00 : f32
    %27 = vector.broadcast %cst_11 : f32 to vector<8x256xf32>
    %28 = arith.select %20, %26, %27 : vector<8x256xi1>, vector<8x256xf32>
    %c0_12 = arith.constant 0 : index
    %c1 = arith.constant 1 : index
    %29 = vector.load %arg7[%c0_12, %c1] : memref<8x290xf32, #tpu.memory_space<vmem>>, vector<8x256xf32>
    %c0_13 = arith.constant 0 : index
    %c2 = arith.constant 2 : index
    %30 = vector.load %arg7[%c0_13, %c2] : memref<8x290xf32, #tpu.memory_space<vmem>>, vector<8x256xf32>
    %cst_14 = arith.constant 0.000000e+00 : f32
    %31 = vector.broadcast %cst_14 : f32 to vector<8x256xf32>
    %32 = arith.select %22, %30, %31 : vector<8x256xi1>, vector<8x256xf32>
    %c0_15 = arith.constant 0 : index
    %c16 = arith.constant 16 : index
    %33 = vector.load %arg7[%c0_15, %c16] : memref<8x290xf32, #tpu.memory_space<vmem>>, vector<8x256xf32>
    %cst_16 = arith.constant 0.000000e+00 : f32
    %34 = vector.broadcast %cst_16 : f32 to vector<8x256xf32>
    %35 = arith.select %20, %33, %34 : vector<8x256xi1>, vector<8x256xf32>
    %c0_17 = arith.constant 0 : index
    %c17_18 = arith.constant 17 : index
    %36 = vector.load %arg7[%c0_17, %c17_18] : memref<8x290xf32, #tpu.memory_space<vmem>>, vector<8x256xf32>
    %c0_19 = arith.constant 0 : index
    %c18 = arith.constant 18 : index
    %37 = vector.load %arg7[%c0_19, %c18] : memref<8x290xf32, #tpu.memory_space<vmem>>, vector<8x256xf32>
    %cst_20 = arith.constant 0.000000e+00 : f32
    %38 = vector.broadcast %cst_20 : f32 to vector<8x256xf32>
    %39 = arith.select %22, %37, %38 : vector<8x256xi1>, vector<8x256xf32>
    %c0_21 = arith.constant 0 : index
    %c32 = arith.constant 32 : index
    %40 = vector.load %arg7[%c0_21, %c32] : memref<8x290xf32, #tpu.memory_space<vmem>>, vector<8x256xf32>
    %cst_22 = arith.constant 0.000000e+00 : f32
    %41 = vector.broadcast %cst_22 : f32 to vector<8x256xf32>
    %42 = arith.select %20, %40, %41 : vector<8x256xi1>, vector<8x256xf32>
    %c0_23 = arith.constant 0 : index
    %c33 = arith.constant 33 : index
    %43 = vector.load %arg7[%c0_23, %c33] : memref<8x290xf32, #tpu.memory_space<vmem>>, vector<8x256xf32>
    %c0_24 = arith.constant 0 : index
    %c34 = arith.constant 34 : index
    %44 = vector.load %arg7[%c0_24, %c34] : memref<8x290xf32, #tpu.memory_space<vmem>>, vector<8x256xf32>
    %cst_25 = arith.constant 0.000000e+00 : f32
    %45 = vector.broadcast %cst_25 : f32 to vector<8x256xf32>
    %46 = arith.select %22, %44, %45 : vector<8x256xi1>, vector<8x256xf32>
    %47 = tpu.concatenate %28, %29, %32, %35, %36, %39, %42, %43, %46 in 0 : vector<8x256xf32>, vector<8x256xf32>, vector<8x256xf32>, vector<8x256xf32>, vector<8x256xf32>, vector<8x256xf32>, vector<8x256xf32>, vector<8x256xf32>, vector<8x256xf32> -> vector<72x256xf32>
    %c0_26 = arith.constant 0 : index
    %c0_27 = arith.constant 0 : index
    %c0_28 = arith.constant 0 : index
    %48 = vector.load %arg2[%c0_26, %c0_27, %c0_28] : memref<2x8x72xf32, #tpu.memory_space<vmem>>, vector<1x8x72xf32>
    %49 = vector.shape_cast %48 : vector<1x8x72xf32> to vector<8x72xf32>
    %cst_29 = arith.constant dense<0.000000e+00> : vector<8x256xf32>
    %50 = tpu.matmul %49, %47, %cst_29 {dimension_numbers = #tpu.dot_dimension_numbers<[1], [0], [0], [1], [0, 0, 1, 1], [], []>} : vector<8x72xf32>, vector<72x256xf32>, vector<8x256xf32> -> vector<8x256xf32>
    %c0_30 = arith.constant 0 : index
    %c0_31 = arith.constant 0 : index
    %c0_32 = arith.constant 0 : index
    %51 = vector.load %arg3[%c0_30, %c0_31, %c0_32] : memref<2x8x1xf32, #tpu.memory_space<vmem>>, vector<1x8x1xf32>
    %52 = vector.shape_cast %51 : vector<1x8x1xf32> to vector<8x1xf32>
    %53 = vector.broadcast %52 : vector<8x1xf32> to vector<8x256xf32>
    %54 = arith.addf %50, %53 : vector<8x256xf32>
    %cst_33 = arith.constant 0.000000e+00 : f32
    %55 = vector.broadcast %cst_33 : f32 to vector<8x256xf32>
    %56 = arith.maximumf %54, %55 : vector<8x256xf32>
    %c0_34 = arith.constant 0 : index
    %c17_35 = arith.constant 17 : index
    %57 = vector.load %arg7[%c0_34, %c17_35] : memref<8x290xf32, #tpu.memory_space<vmem>>, vector<8x256xf32>
    tpu.vector_store %arg7[%c0_34, %c17_35], %56 {strides = array<i32>} : memref<8x290xf32, #tpu.memory_space<vmem>>, vector<8x256xf32>,
    %c0_36 = arith.constant 0 : index
    %c0_37 = arith.constant 0 : index
    %58 = vector.load %arg7[%c0_36, %c0_37] : memref<8x290xf32, #tpu.memory_space<vmem>>, vector<8x256xf32>
    %cst_38 = arith.constant 0.000000e+00 : f32
    %59 = vector.broadcast %cst_38 : f32 to vector<8x256xf32>
    %60 = arith.select %20, %58, %59 : vector<8x256xi1>, vector<8x256xf32>
    %c0_39 = arith.constant 0 : index
    %c1_40 = arith.constant 1 : index
    %61 = vector.load %arg7[%c0_39, %c1_40] : memref<8x290xf32, #tpu.memory_space<vmem>>, vector<8x256xf32>
    %c0_41 = arith.constant 0 : index
    %c2_42 = arith.constant 2 : index
    %62 = vector.load %arg7[%c0_41, %c2_42] : memref<8x290xf32, #tpu.memory_space<vmem>>, vector<8x256xf32>
    %cst_43 = arith.constant 0.000000e+00 : f32
    %63 = vector.broadcast %cst_43 : f32 to vector<8x256xf32>
    %64 = arith.select %22, %62, %63 : vector<8x256xi1>, vector<8x256xf32>
    %c0_44 = arith.constant 0 : index
    %c16_45 = arith.constant 16 : index
    %65 = vector.load %arg7[%c0_44, %c16_45] : memref<8x290xf32, #tpu.memory_space<vmem>>, vector<8x256xf32>
    %cst_46 = arith.constant 0.000000e+00 : f32
    %66 = vector.broadcast %cst_46 : f32 to vector<8x256xf32>
    %67 = arith.select %20, %65, %66 : vector<8x256xi1>, vector<8x256xf32>
    %c0_47 = arith.constant 0 : index
    %c17_48 = arith.constant 17 : index
    %68 = vector.load %arg7[%c0_47, %c17_48] : memref<8x290xf32, #tpu.memory_space<vmem>>, vector<8x256xf32>
    %c0_49 = arith.constant 0 : index
    %c18_50 = arith.constant 18 : index
    %69 = vector.load %arg7[%c0_49, %c18_50] : memref<8x290xf32, #tpu.memory_space<vmem>>, vector<8x256xf32>
    %cst_51 = arith.constant 0.000000e+00 : f32
    %70 = vector.broadcast %cst_51 : f32 to vector<8x256xf32>
    %71 = arith.select %22, %69, %70 : vector<8x256xi1>, vector<8x256xf32>
    %c0_52 = arith.constant 0 : index
    %c32_53 = arith.constant 32 : index
    %72 = vector.load %arg7[%c0_52, %c32_53] : memref<8x290xf32, #tpu.memory_space<vmem>>, vector<8x256xf32>
    %cst_54 = arith.constant 0.000000e+00 : f32
    %73 = vector.broadcast %cst_54 : f32 to vector<8x256xf32>
    %74 = arith.select %20, %72, %73 : vector<8x256xi1>, vector<8x256xf32>
    %c0_55 = arith.constant 0 : index
    %c33_56 = arith.constant 33 : index
    %75 = vector.load %arg7[%c0_55, %c33_56] : memref<8x290xf32, #tpu.memory_space<vmem>>, vector<8x256xf32>
    %c0_57 = arith.constant 0 : index
    %c34_58 = arith.constant 34 : index
    %76 = vector.load %arg7[%c0_57, %c34_58] : memref<8x290xf32, #tpu.memory_space<vmem>>, vector<8x256xf32>
    %cst_59 = arith.constant 0.000000e+00 : f32
    %77 = vector.broadcast %cst_59 : f32 to vector<8x256xf32>
    %78 = arith.select %22, %76, %77 : vector<8x256xi1>, vector<8x256xf32>
    %79 = tpu.concatenate %60, %61, %64, %67, %68, %71, %74, %75, %78 in 0 : vector<8x256xf32>, vector<8x256xf32>, vector<8x256xf32>, vector<8x256xf32>, vector<8x256xf32>, vector<8x256xf32>, vector<8x256xf32>, vector<8x256xf32>, vector<8x256xf32> -> vector<72x256xf32>
    %c1_60 = arith.constant 1 : index
    %c0_61 = arith.constant 0 : index
    %c0_62 = arith.constant 0 : index
    %80 = vector.load %arg2[%c1_60, %c0_61, %c0_62] : memref<2x8x72xf32, #tpu.memory_space<vmem>>, vector<1x8x72xf32>
    %81 = vector.shape_cast %80 : vector<1x8x72xf32> to vector<8x72xf32>
    %cst_63 = arith.constant dense<0.000000e+00> : vector<8x256xf32>
    %82 = tpu.matmul %81, %79, %cst_63 {dimension_numbers = #tpu.dot_dimension_numbers<[1], [0], [0], [1], [0, 0, 1, 1], [], []>} : vector<8x72xf32>, vector<72x256xf32>, vector<8x256xf32> -> vector<8x256xf32>
    %c1_64 = arith.constant 1 : index
    %c0_65 = arith.constant 0 : index
    %c0_66 = arith.constant 0 : index
    %83 = vector.load %arg3[%c1_64, %c0_65, %c0_66] : memref<2x8x1xf32, #tpu.memory_space<vmem>>, vector<1x8x1xf32>
    %84 = vector.shape_cast %83 : vector<1x8x1xf32> to vector<8x1xf32>
    %85 = vector.broadcast %84 : vector<8x1xf32> to vector<8x256xf32>
    %86 = arith.addf %82, %85 : vector<8x256xf32>
    %cst_67 = arith.constant 0.000000e+00 : f32
    %87 = vector.broadcast %cst_67 : f32 to vector<8x256xf32>
    %88 = arith.maximumf %86, %87 : vector<8x256xf32>
    %c0_68 = arith.constant 0 : index
    %c0_69 = arith.constant 0 : index
    %89 = vector.load %arg4[%c0_68, %c0_69] : memref<4x8xf32, #tpu.memory_space<vmem>>, vector<4x8xf32>
    %cst_70 = arith.constant dense<0.000000e+00> : vector<4x256xf32>
    %90 = tpu.matmul %89, %88, %cst_70 {dimension_numbers = #tpu.dot_dimension_numbers<[1], [0], [0], [1], [0, 0, 1, 1], [], []>} : vector<4x8xf32>, vector<8x256xf32>, vector<4x256xf32> -> vector<4x256xf32>
    %c0_71 = arith.constant 0 : index
    %c0_72 = arith.constant 0 : index
    %91 = vector.load %arg5[%c0_71, %c0_72] : memref<4x1xf32, #tpu.memory_space<vmem>>, vector<4x1xf32>
    %92 = vector.broadcast %91 : vector<4x1xf32> to vector<4x256xf32>
    %93 = arith.addf %90, %92 : vector<4x256xf32>
    %c0_73 = arith.constant 0 : index
    %c0_74 = arith.constant 0 : index
    %c0_75 = arith.constant 0 : index
    %94 = vector.load %arg6[%c0_73, %c0_74, %c0_75] : memref<1x4x256xf32, #tpu.memory_space<vmem>>, vector<1x4x256xf32>
    %95 = vector.shape_cast %94 : vector<1x4x256xf32> to vector<4x256xf32>
    %96 = vector.shape_cast %93 : vector<4x256xf32> to vector<1x4x256xf32>
    tpu.vector_store %arg6[%c0_73, %c0_74, %c0_75], %96 {strides = array<i32>} : memref<1x4x256xf32, #tpu.memory_space<vmem>>, vector<1x4x256xf32>,
    return
  }
  func.func @transform_0(%arg0: i32) -> (i32, i32, i32) {
    %c0_i32 = arith.constant 0 : i32
    %c0_i32_0 = arith.constant 0 : i32
    %c0_i32_1 = arith.constant 0 : i32
    return %arg0, %c0_i32, %c0_i32_0 : i32, i32, i32
  }
  func.func @transform_1(%arg0: i32) -> (i32, i32, i32) {
    %c0_i32 = arith.constant 0 : i32
    %c0_i32_0 = arith.constant 0 : i32
    %c0_i32_1 = arith.constant 0 : i32
    %c0_i32_2 = arith.constant 0 : i32
    return %c0_i32, %c0_i32_0, %c0_i32_1 : i32, i32, i32
  }
  func.func @transform_2(%arg0: i32) -> (i32, i32, i32) {
    %c0_i32 = arith.constant 0 : i32
    %c0_i32_0 = arith.constant 0 : i32
    %c0_i32_1 = arith.constant 0 : i32
    %c0_i32_2 = arith.constant 0 : i32
    return %c0_i32, %c0_i32_0, %c0_i32_1 : i32, i32, i32
  }
  func.func @transform_3(%arg0: i32) -> (i32, i32) {
    %c0_i32 = arith.constant 0 : i32
    %c0_i32_0 = arith.constant 0 : i32
    %c0_i32_1 = arith.constant 0 : i32
    return %c0_i32, %c0_i32_0 : i32, i32
  }
  func.func @transform_4(%arg0: i32) -> (i32, i32) {
    %c0_i32 = arith.constant 0 : i32
    %c0_i32_0 = arith.constant 0 : i32
    %c0_i32_1 = arith.constant 0 : i32
    return %c0_i32, %c0_i32_0 : i32, i32
  }
  func.func @transform_5(%arg0: i32) -> (i32, i32, i32) {
    %c0_i32 = arith.constant 0 : i32
    %c0_i32_0 = arith.constant 0 : i32
    %c0_i32_1 = arith.constant 0 : i32
    return %arg0, %c0_i32, %c0_i32_0 : i32, i32, i32
  }
}

</mosaic_0001>

<llo_original>
// kernel: tpu_custom_call.1
$region0: #{tpu_custom_call.1}
  #allocation0 [shape = 'u32[]', space=smem, size = 0x4, offset = 0x4, fixed_abs, tag = 'smem constant byte address 0x4 - core index']
  #allocation1 [shape = 'u32[72,128]{1,0:T(1,128)}', space=vmem, size = 0x9000, scoped, tag = 'internal scratch']
  #allocation2 [shape = 'f32[8,290]{1,0:T(8,128)}', space=vmem, size = 0x3000, scoped, tag = 'scratch operand']
  %s0 = inlined_call_operand.hbm [shape: f32[2,8,256], index: 0, kind: input, shape index: {}]
  %s1 = inlined_call_operand.vmem [shape: f32[2,8,72], index: 1, kind: input, shape index: {}]
  %s2 = inlined_call_operand.vmem [shape: f32[2,8,1], index: 2, kind: input, shape index: {}]
  %s3 = inlined_call_operand.vmem [shape: f32[4,8], index: 3, kind: input, shape index: {}]
  %s4 = inlined_call_operand.vmem [shape: f32[4,1], index: 4, kind: input, shape index: {}]
  %s5 = inlined_call_operand.hbm [shape: f32[2,4,256], index: 5, kind: output, shape index: {}]
  %s6 = sld [smem:[#allocation0]]
  $region57: #{tpu_custom_call.1} parent=0
    _
  %s8 = ssub.s32 1, %s6
  %s9 = scalar_select 0, %s8, %s6
  $region1: #{tpu_custom_call.1} parent=0
    #allocation3 [shape = 'u8[16384]{0}', space=vmem, size = 0x4000, scoped, tag = 'input window, operand 0']
    #allocation4 [shape = 's32[2]{0}', space=sflag, size = 0x8, scoped, tag = 'scoped memory for tpu_custom_call.1']
    #allocation5 [shape = 's32[2]{0}', space=sflag, size = 0x8, scoped, tag = 'scoped memory for tpu_custom_call.1']
    #allocation6 [shape = 'u8[8192]{0}', space=vmem, size = 0x2000, scoped, tag = 'output window, operand 0']
    %10 = vsyncpa [#allocation4], 0
    %s11 = scalar_lea.sflag [#allocation4], 1
    %12 = vsyncpa %s11, 0
    %13 = vsyncpa [#allocation5], 0
    %s14 = scalar_lea.sflag [#allocation5], 1
    %15 = vsyncpa %s14, 0
    loop: start=0, step=1, limit=4
    $region2: #{tpu_custom_call.1} parent=1 // loop_pre_header
      _
    $region3: #{tpu_custom_call.1} parent=1 // loop_header
      %s17 = sphi 0, %s21
      %p18 = scmp.ge.s32.totalorder %s17, 4
      %s27 = sphi 0, %s29
      %s30 = sphi 0, %s27
      %s31 = sphi 0, %s30
      %s47 = sphi 0, %s31
      %s51 = sphi 0, %s51
      %s53 = sphi 0, %s51
      %s54 = sphi 0, %s53
      %s68 = sphi 0, %s54
      %s72 = sphi 0, %s72
      %s74 = sphi 0, %s72
      %s75 = sphi 0, %s74
      %s89 = sphi 0, %s75
      %s93 = sphi 0, %s93
      %s95 = sphi 0, %s93
      %s96 = sphi 0, %s95
      %s110 = sphi 0, %s96
      %s114 = sphi 0, %s114
      %s116 = sphi 0, %s114
      %s117 = sphi 0, %s116
      %s131 = sphi 0, %s117
      %s137 = sphi 0, %s139
      %s140 = sphi 0, %s137
      %s141 = sphi 0, %s140
      %s157 = sphi 0, %s141
    $region4: #{tpu_custom_call.1} parent=1 // loop_header_branch
      %20 = sbr.rel (%p18) target = $region8
    $region5: #{tpu_custom_call.1} parent=1 // loop_body
      %s22 = ssub.s32 %s17, 1
      %s23 = ssub.s32 %s17, 2
      %s24 = sadd.s32 %s17, 1
      %s25 = ssub.s32 %s17, %s24
      %p26 = scmp.eq.s32.totalorder %s25, 0
      %s28 = sadd.s32 %s27, 1
      %s29 = scalar_select %p26, %s27, %s28
      %p32 = pneg %p26
      %p33 = scmp.eq.s32.totalorder %s17, 1
      %p34 = por %p32, %p33
      %p35 = scmp.ne.s32.totalorder %s27, %s30
      %p36 = scmp.eq.s32.totalorder %s17, 0
      %p37 = por %p35, %p36
      %p38 = scmp.ne.s32.totalorder %s27, %s30
      %p39 = scmp.eq.s32.totalorder %s22, 1
      %p40 = por %p38, %p39
      %p41 = scmp.ne.s32.totalorder %s30, %s31
      %p42 = scmp.eq.s32.totalorder %s22, 0
      %p43 = por %p41, %p42
      %p44 = scmp.ne.s32.totalorder %s30, %s31
      %p45 = scmp.eq.s32.totalorder %s23, 1
      %p46 = por %p44, %p45
      %p48 = scmp.ne.s32.totalorder %s31, %s47
      %p49 = scmp.eq.s32.totalorder %s23, 0
      %p50 = por %p48, %p49
      %s52 = sadd.s32 %s51, 1
      %p55 = scmp.eq.s32.totalorder %s17, 1
      %p56 = scmp.ne.s32.totalorder %s51, %s53
      %p57 = scmp.eq.s32.totalorder %s17, 0
      %p58 = por %p56, %p57
      %p59 = scmp.ne.s32.totalorder %s51, %s53
      %p60 = scmp.eq.s32.totalorder %s22, 1
      %p61 = por %p59, %p60
      %p62 = scmp.ne.s32.totalorder %s53, %s54
      %p63 = scmp.eq.s32.totalorder %s22, 0
      %p64 = por %p62, %p63
      %p65 = scmp.ne.s32.totalorder %s53, %s54
      %p66 = scmp.eq.s32.totalorder %s23, 1
      %p67 = por %p65, %p66
      %p69 = scmp.ne.s32.totalorder %s54, %s68
      %p70 = scmp.eq.s32.totalorder %s23, 0
      %p71 = por %p69, %p70
      %s73 = sadd.s32 %s72, 1
      %p76 = scmp.eq.s32.totalorder %s17, 1
      %p77 = scmp.ne.s32.totalorder %s72, %s74
      %p78 = scmp.eq.s32.totalorder %s17, 0
      %p79 = por %p77, %p78
      %p80 = scmp.ne.s32.totalorder %s72, %s74
      %p81 = scmp.eq.s32.totalorder %s22, 1
      %p82 = por %p80, %p81
      %p83 = scmp.ne.s32.totalorder %s74, %s75
      %p84 = scmp.eq.s32.totalorder %s22, 0
      %p85 = por %p83, %p84
      %p86 = scmp.ne.s32.totalorder %s74, %s75
      %p87 = scmp.eq.s32.totalorder %s23, 1
      %p88 = por %p86, %p87
      %p90 = scmp.ne.s32.totalorder %s75, %s89
      %p91 = scmp.eq.s32.totalorder %s23, 0
      %p92 = por %p90, %p91
      %s94 = sadd.s32 %s93, 1
      %p97 = scmp.eq.s32.totalorder %s17, 1
      %p98 = scmp.ne.s32.totalorder %s93, %s95
      %p99 = scmp.eq.s32.totalorder %s17, 0
      %p100 = por %p98, %p99
      %p101 = scmp.ne.s32.totalorder %s93, %s95
      %p102 = scmp.eq.s32.totalorder %s22, 1
      %p103 = por %p101, %p102
      %p104 = scmp.ne.s32.totalorder %s95, %s96
      %p105 = scmp.eq.s32.totalorder %s22, 0
      %p106 = por %p104, %p105
      %p107 = scmp.ne.s32.totalorder %s95, %s96
      %p108 = scmp.eq.s32.totalorder %s23, 1
      %p109 = por %p107, %p108
      %p111 = scmp.ne.s32.totalorder %s96, %s110
      %p112 = scmp.eq.s32.totalorder %s23, 0
      %p113 = por %p111, %p112
      %s115 = sadd.s32 %s114, 1
      %p118 = scmp.eq.s32.totalorder %s17, 1
      %p119 = scmp.ne.s32.totalorder %s114, %s116
      %p120 = scmp.eq.s32.totalorder %s17, 0
      %p121 = por %p119, %p120
      %p122 = scmp.ne.s32.totalorder %s114, %s116
      %p123 = scmp.eq.s32.totalorder %s22, 1
      %p124 = por %p122, %p123
      %p125 = scmp.ne.s32.totalorder %s116, %s117
      %p126 = scmp.eq.s32.totalorder %s22, 0
      %p127 = por %p125, %p126
      %p128 = scmp.ne.s32.totalorder %s116, %s117
      %p129 = scmp.eq.s32.totalorder %s23, 1
      %p130 = por %p128, %p129
      %p132 = scmp.ne.s32.totalorder %s117, %s131
      %p133 = scmp.eq.s32.totalorder %s23, 0
      %p134 = por %p132, %p133
      %s135 = ssub.s32 %s17, %s24
      %p136 = scmp.eq.s32.totalorder %s135, 0
      %s138 = sadd.s32 %s137, 1
      %s139 = scalar_select %p136, %s137, %s138
      %p142 = pneg %p136
      %p143 = scmp.eq.s32.totalorder %s17, 1
      %p144 = por %p142, %p143
      %p145 = scmp.ne.s32.totalorder %s137, %s140
      %p146 = scmp.eq.s32.totalorder %s17, 0
      %p147 = por %p145, %p146
      %p148 = scmp.ne.s32.totalorder %s137, %s140
      %p149 = scmp.eq.s32.totalorder %s22, 1
      %p150 = por %p148, %p149
      %p151 = scmp.ne.s32.totalorder %s140, %s141
      %p152 = scmp.eq.s32.totalorder %s22, 0
      %p153 = por %p151, %p152
      %p154 = scmp.ne.s32.totalorder %s140, %s141
      %p155 = scmp.eq.s32.totalorder %s23, 1
      %p156 = por %p154, %p155
      %p158 = scmp.ne.s32.totalorder %s141, %s157
      %p159 = scmp.eq.s32.totalorder %s23, 0
      %p160 = por %p158, %p159
      %p161 = scmp.le.s32.totalorder 1, %s17
      %p162 = scmp.lt.s32.totalorder %s17, 3
      %p163 = pnand %p161, %p162
      %p164 = pneg %p163
      // Predicated region
      $region9: #{tpu_custom_call.1} parent=5 // pred_check
        _
      $region10: #{tpu_custom_call.1} parent=5 // pred_check_branch
        %166 = sbr.rel (%p163) target = $region12
      $region11: #{tpu_custom_call.1} parent=5 // pred_region
        %s167 = ssub.s32 %s17, 1
        // Predicated region
        $region13: #{tpu_custom_call.1} parent=11 // pred_check
          %p168 = pneg %p64
        $region14: #{tpu_custom_call.1} parent=11 // pred_check_branch
          %170 = sbr.rel (%p168) target = $region16
        $region15: #{tpu_custom_call.1} parent=11 // pred_region
          _
        $region16: #{tpu_custom_call.1} parent=11 // pred_fallthru
          _
        // Predicated region
        $region17: #{tpu_custom_call.1} parent=11 // pred_check
          %p171 = pneg %p85
        $region18: #{tpu_custom_call.1} parent=11 // pred_check_branch
          %173 = sbr.rel (%p171) target = $region20
        $region19: #{tpu_custom_call.1} parent=11 // pred_region
          _
        $region20: #{tpu_custom_call.1} parent=11 // pred_fallthru
          _
        // Predicated region
        $region21: #{tpu_custom_call.1} parent=11 // pred_check
          %p174 = pneg %p106
        $region22: #{tpu_custom_call.1} parent=11 // pred_check_branch
          %176 = sbr.rel (%p174) target = $region24
        $region23: #{tpu_custom_call.1} parent=11 // pred_region
          _
        $region24: #{tpu_custom_call.1} parent=11 // pred_fallthru
          _
        // Predicated region
        $region25: #{tpu_custom_call.1} parent=11 // pred_check
          %p177 = pneg %p127
        $region26: #{tpu_custom_call.1} parent=11 // pred_check_branch
          %179 = sbr.rel (%p177) target = $region28
        $region27: #{tpu_custom_call.1} parent=11 // pred_region
          _
        $region28: #{tpu_custom_call.1} parent=11 // pred_fallthru
          _
      $region12: #{tpu_custom_call.1} parent=5 // pred_fallthru
        _
      %p180 = scmp.lt.s32.totalorder %s17, 2
      // Predicated region
      $region29: #{tpu_custom_call.1} parent=5 // pred_check
        %p181 = pneg %p180
      $region30: #{tpu_custom_call.1} parent=5 // pred_check_branch
        %183 = sbr.rel (%p181) target = $region32
      $region31: #{tpu_custom_call.1} parent=5 // pred_region
        // Predicated region
        $region33: #{tpu_custom_call.1} parent=31 // pred_check
          %p184 = pneg %p37
        $region34: #{tpu_custom_call.1} parent=31 // pred_check_branch
          %186 = sbr.rel (%p184) target = $region36
        $region35: #{tpu_custom_call.1} parent=31 // pred_region
          %s187 = sand.u32 %s27, 1
          %s188 = scalar_lea.sflag [#allocation4], %s187
          %s189 = sand.u32 %s27, 1
          %s190 = smul.addr %s189, 16
          %s191 = scalar_lea.vmem [#allocation3], %s190
          %193 = vsyncadd %s188, 0
          %s194 = smul.addr %s17, 2
          %s195 = smul.addr %s194, 8
          %s196 = scalar_lea.hbm %s0, %s195
          %s198 = sshll.u32 %s196, 4
          %s199 = int_to_ptr.hbm [resolvable:$true] %s198
          %s200 = sshll.u32 %s191, 4
          %s201 = int_to_ptr.vmem [resolvable:$true] %s200
          %203 = dma.hbm_to_vmem [thread:$0]  %s199, 256, %s201, %s188
        $region36: #{tpu_custom_call.1} parent=31 // pred_fallthru
          _
      $region32: #{tpu_custom_call.1} parent=5 // pred_fallthru
        _
      %p204 = scmp.le.s32.totalorder 1, %s17
      %p205 = scmp.lt.s32.totalorder %s17, 3
      %p206 = pnand %p204, %p205
      %p207 = pneg %p206
      // Predicated region
      $region37: #{tpu_custom_call.1} parent=5 // pred_check
        _
      $region38: #{tpu_custom_call.1} parent=5 // pred_check_branch
        %209 = sbr.rel (%p206) target = $region40
      $region39: #{tpu_custom_call.1} parent=5 // pred_region
        %s210 = ssub.s32 %s17, 1
        %s211 = sand.u32 %s30, 1
        %s212 = scalar_lea.sflag [#allocation4], %s211
        %s213 = sand.u32 %s30, 1
        %s214 = smul.addr %s213, 16
        %s215 = scalar_lea.vmem [#allocation3], %s214
        // Predicated region
        $region41: #{tpu_custom_call.1} parent=39 // pred_check
          %p216 = pneg %p43
        $region42: #{tpu_custom_call.1} parent=39 // pred_check_branch
          %218 = sbr.rel (%p216) target = $region44
        $region43: #{tpu_custom_call.1} parent=39 // pred_region
          %220 = dma.done %s212, 256
        $region44: #{tpu_custom_call.1} parent=39 // pred_fallthru
          _
        %s221 = sand.u32 %s30, 1
        %s222 = scalar_lea.sflag [#allocation4], %s221
        %s223 = sand.u32 %s30, 1
        %s224 = smul.addr %s223, 16
        %s225 = scalar_lea.vmem [#allocation3], %s224
        %p226 = pneg %p43
        %p227 = pneg %p40
        %p228 = pneg %p64
        %p229 = pneg %p61
        %p230 = pneg %p85
        %p231 = pneg %p82
        %p232 = pneg %p106
        %p233 = pneg %p103
        %p234 = pneg %p127
        %p235 = pneg %p124
        %p236 = pneg %p153
        %p237 = pneg %p150
        %s238 = sand.u32 %s140, 1
        %s239 = scalar_lea.sflag [#allocation5], %s238
        %s240 = sand.u32 %s140, 1
        %s241 = smul.addr %s240, 8
        %s242 = scalar_lea.vmem [#allocation6], %s241
        %243 = vst [vmem:[#allocation2] sm:$0xff] 0.0
        %244 = vst [vmem:[#allocation2 + $0x8] sm:$0xff] 0.0
        %vm245 = vcmask 277504
        %246 = vst.msk [vmem:[#allocation2 + $0x10] sm:$0xff] %vm245, 0.0
        %v247 = vlaneseq
        %v248 = vand.u32 %v247, 127
        %v249 = vadd.s32 %v248, 128
        %vm250 = vcmp.lt.s32.totalorder %v248, 0
        %v251 = vsub.s32 0, %v248
        %v252 = vsel %vm250, %v251, %v248
        %v253 = vshrl.u32 %v252, 4
        %v254 = vand.u32 %v252, 15
        %v255 = vsub.s32 0, %v254
        %v256 = vsel %vm250, %v255, %v254
        %vm257 = vcmp.lt.s32.totalorder %v249, 0
        %v258 = vsub.s32 0, %v249
        %v259 = vsel %vm257, %v258, %v249
        %v260 = vshrl.u32 %v259, 4
        %v261 = vand.u32 %v259, 15
        %v262 = vsub.s32 0, %v261
        %v263 = vsel %vm257, %v262, %v261
        %vm264 = vcmp.ne.s32.totalorder %v256, 0
        %vm265 = vcmp.ne.s32.totalorder %v263, 0
        %vm266 = vcmp.lt.s32.totalorder %v256, 0
        %vm267 = vcmp.lt.s32.totalorder %v263, 0
        %vm268 = vmand %vm266, %vm264
        %vm269 = vmand %vm267, %vm265
        %v270 = vadd.s32 %v256, 16
        %v271 = vadd.s32 %v263, 16
        %v272 = vsel %vm268, %v270, %v256
        %v273 = vsel %vm269, %v271, %v263
        %vm274 = vcmp.ge.s32.totalorder %v272, 1
        %vm275 = vcmp.ge.s32.totalorder %v273, 1
        %vm276 = vcmp.le.s32.totalorder %v272, 14
        %vm277 = vcmp.le.s32.totalorder %v273, 14
        %v278 = vld [vmem:[%s215] sm:$0xff]
        %v279 = vld [vmem:[%s215 + $0x8] sm:$0xff]
        %282 = vrot.lane.b32.xlu0 %v278, 17
        %v283 = vpop.permute.xlu0 %282
        %284 = vrot.lane.b32.xlu0 %v279, 17
        %v285 = vpop.permute.xlu0 %284
        %vm286 = vcmask 138240
        %v287 = vsel %vm286, %v283, %v285
        %vm291 = vcmask 1047688
        %292 = vst.msk [vmem:[#allocation2] sm:$0xff] %vm291, %v283
        %293 = vst [vmem:[#allocation2 + $0x8] sm:$0xff] %v287
        %294 = vst.msk [vmem:[#allocation2 + $0x10] sm:$0xff] %vm286, %v285
        %v295 = vld [vmem:[#allocation2] sm:$0xff]
        %v296 = vld [vmem:[#allocation2 + $0x8] sm:$0xff]
        %v297 = vsel %vm274, %v295, 0.0
        %v298 = vsel %vm275, %v296, 0.0
        %v299 = vld [vmem:[#allocation2 + $0x10] sm:$0xff]
        %303 = vrot.lane.b32.xlu0 %v295, 126
        %v304 = vpop.permute.xlu0 %303
        %305 = vrot.lane.b32.xlu0 %v296, 126
        %v306 = vpop.permute.xlu0 %305
        %307 = vrot.lane.b32.xlu0 %v299, 126
        %v308 = vpop.permute.xlu0 %307
        %vm309 = vcmask 1031168
        %v310 = vsel %vm309, %v304, %v306
        %v311 = vsel %vm309, %v306, %v308
        %v314 = vsel %vm276, %v310, 0.0
        %v315 = vsel %vm277, %v311, 0.0
        %316 = vrot.lane.b32.xlu0 %v295, 112
        %v317 = vpop.permute.xlu0 %316
        %318 = vrot.lane.b32.xlu0 %v296, 112
        %v319 = vpop.permute.xlu0 %318
        %320 = vrot.lane.b32.xlu0 %v299, 112
        %v321 = vpop.permute.xlu0 %320
        %vm322 = vcmask 916480
        %v323 = vsel %vm322, %v317, %v319
        %v324 = vsel %vm322, %v319, %v321
        %v327 = vsel %vm274, %v323, 0.0
        %v328 = vsel %vm275, %v324, 0.0
        %329 = vrot.lane.b32.xlu0 %v295, 110
        %v330 = vpop.permute.xlu0 %329
        %331 = vrot.lane.b32.xlu0 %v296, 110
        %v332 = vpop.permute.xlu0 %331
        %333 = vrot.lane.b32.xlu0 %v299, 110
        %v334 = vpop.permute.xlu0 %333
        %vm335 = vcmask 900096
        %v336 = vsel %vm335, %v330, %v332
        %v337 = vsel %vm335, %v332, %v334
        %v340 = vsel %vm276, %v336, 0.0
        %v341 = vsel %vm277, %v337, 0.0
        %342 = vrot.lane.b32.xlu0 %v295, 96
        %v343 = vpop.permute.xlu0 %342
        %344 = vrot.lane.b32.xlu0 %v296, 96
        %v345 = vpop.permute.xlu0 %344
        %346 = vrot.lane.b32.xlu0 %v299, 96
        %v347 = vpop.permute.xlu0 %346
        %vm348 = vcmask 785408
        %v349 = vsel %vm348, %v343, %v345
        %v350 = vsel %vm348, %v345, %v347
        %v353 = vsel %vm274, %v349, 0.0
        %v354 = vsel %vm275, %v350, 0.0
        %355 = vrot.lane.b32.xlu0 %v295, 94
        %v356 = vpop.permute.xlu0 %355
        %357 = vrot.lane.b32.xlu0 %v296, 94
        %v358 = vpop.permute.xlu0 %357
        %359 = vrot.lane.b32.xlu0 %v299, 94
        %v360 = vpop.permute.xlu0 %359
        %vm361 = vcmask 769024
        %v362 = vsel %vm361, %v356, %v358
        %v363 = vsel %vm361, %v358, %v360
        %v366 = vsel %vm276, %v362, 0.0
        %v367 = vsel %vm277, %v363, 0.0
        %368 = vrot.lane.b32.xlu0 %v295, 127
        %v369 = vpop.permute.xlu0 %368
        %370 = vrot.lane.b32.xlu0 %v296, 127
        %v371 = vpop.permute.xlu0 %370
        %372 = vrot.lane.b32.xlu0 %v299, 127
        %v373 = vpop.permute.xlu0 %372
        %vm374 = vcmask 1039360
        %v375 = vsel %vm374, %v369, %v371
        %v376 = vsel %vm374, %v371, %v373
        %379 = vrot.lane.b32.xlu0 %v295, 111
        %v380 = vpop.permute.xlu0 %379
        %381 = vrot.lane.b32.xlu0 %v296, 111
        %v382 = vpop.permute.xlu0 %381
        %383 = vrot.lane.b32.xlu0 %v299, 111
        %v384 = vpop.permute.xlu0 %383
        %vm385 = vcmask 908288
        %v386 = vsel %vm385, %v380, %v382
        %v387 = vsel %vm385, %v382, %v384
        %390 = vrot.lane.b32.xlu0 %v295, 95
        %v391 = vpop.permute.xlu0 %390
        %392 = vrot.lane.b32.xlu0 %v296, 95
        %v393 = vpop.permute.xlu0 %392
        %394 = vrot.lane.b32.xlu0 %v299, 95
        %v395 = vpop.permute.xlu0 %394
        %vm396 = vcmask 777216
        %v397 = vsel %vm396, %v391, %v393
        %v398 = vsel %vm396, %v393, %v395
        %v401 = vld [vmem:[%s1] sm:$0xff]
        %v402 = vld [vmem:[%s2] sm:$0xff]
        %404 = vset.pattern.permute.xlu0 0
        %405 = vperm.xlu0 %404, %v402
        %v406 = vpop.permute.xlu0 %405
        %vm408 = vcmask 588800
        %v410 = vsel %vm408, %v401, 0
        %412 = vmatpush.msra.mxu0 0.0
        %413 = vmatpush.msra.mxu0 0.0
        %414 = vmatpush.msra.mxu0 0.0
        %415 = vmatpush.msra.mxu0 0.0
        %416 = vmatpush.msra.mxu0 0.0
        %417 = vmatpush.msra.mxu0 0.0
        %418 = vmatpush.msra.mxu0 0.0
        %419 = vmatpush.msra.mxu0 %v366
        %420 = vmatpush.msra.mxu0 %v397
        %421 = vmatpush.msra.mxu0 %v353
        %422 = vmatpush.msra.mxu0 %v340
        %423 = vmatpush.msra.mxu0 %v386
        %424 = vmatpush.msra.mxu0 %v327
        %425 = vmatpush.msra.mxu0 %v314
        %426 = vmatpush.msra.mxu0 %v375
        %427 = vmatpush.msra.mxu0 %v297
        %428 = vmatmul.f32.gmra.mxu0 %v410
        %v429 = vpop.f32.mrf.mxu0
        %v430 = vadd.f32 %v406, %v429
        %431 = vdwg.mxu0
        %432 = vmatpush.msra.mxu0 0.0
        %433 = vmatpush.msra.mxu0 0.0
        %434 = vmatpush.msra.mxu0 0.0
        %435 = vmatpush.msra.mxu0 0.0
        %436 = vmatpush.msra.mxu0 0.0
        %437 = vmatpush.msra.mxu0 0.0
        %438 = vmatpush.msra.mxu0 0.0
        %439 = vmatpush.msra.mxu0 %v367
        %440 = vmatpush.msra.mxu0 %v398
        %441 = vmatpush.msra.mxu0 %v354
        %442 = vmatpush.msra.mxu0 %v341
        %443 = vmatpush.msra.mxu0 %v387
        %444 = vmatpush.msra.mxu0 %v328
        %445 = vmatpush.msra.mxu0 %v315
        %446 = vmatpush.msra.mxu0 %v376
        %447 = vmatpush.msra.mxu0 %v298
        %448 = vmatmul.f32.gmra.mxu0 %v410
        %v449 = vpop.f32.mrf.mxu0
        %v450 = vadd.f32 %v406, %v449
        %451 = vdwg.mxu0
        %v452 = vmax.f32 %v430, 0.0
        %v453 = vmax.f32 %v450, 0.0
        %456 = vrot.lane.b32.xlu0 %v452, 17
        %v457 = vpop.permute.xlu0 %456
        %458 = vrot.lane.b32.xlu0 %v453, 17
        %v459 = vpop.permute.xlu0 %458
        %v460 = vsel %vm286, %v457, %v459
        %464 = vst.msk [vmem:[#allocation2] sm:$0xff] %vm291, %v457
        %465 = vst [vmem:[#allocation2 + $0x8] sm:$0xff] %v460
        %466 = vst.msk [vmem:[#allocation2 + $0x10] sm:$0xff] %vm286, %v459
        %v467 = vld [vmem:[#allocation2] sm:$0xff]
        %v468 = vld [vmem:[#allocation2 + $0x8] sm:$0xff]
        %v469 = vsel %vm274, %v467, 0.0
        %v470 = vsel %vm275, %v468, 0.0
        %v471 = vld [vmem:[#allocation2 + $0x10] sm:$0xff]
        %475 = vrot.lane.b32.xlu0 %v467, 126
        %v476 = vpop.permute.xlu0 %475
        %477 = vrot.lane.b32.xlu0 %v468, 126
        %v478 = vpop.permute.xlu0 %477
        %479 = vrot.lane.b32.xlu0 %v471, 126
        %v480 = vpop.permute.xlu0 %479
        %v481 = vsel %vm309, %v476, %v478
        %v482 = vsel %vm309, %v478, %v480
        %v485 = vsel %vm276, %v481, 0.0
        %v486 = vsel %vm277, %v482, 0.0
        %487 = vrot.lane.b32.xlu0 %v467, 112
        %v488 = vpop.permute.xlu0 %487
        %489 = vrot.lane.b32.xlu0 %v468, 112
        %v490 = vpop.permute.xlu0 %489
        %491 = vrot.lane.b32.xlu0 %v471, 112
        %v492 = vpop.permute.xlu0 %491
        %v493 = vsel %vm322, %v488, %v490
        %v494 = vsel %vm322, %v490, %v492
        %v497 = vsel %vm274, %v493, 0.0
        %v498 = vsel %vm275, %v494, 0.0
        %499 = vrot.lane.b32.xlu0 %v467, 110
        %v500 = vpop.permute.xlu0 %499
        %501 = vrot.lane.b32.xlu0 %v468, 110
        %v502 = vpop.permute.xlu0 %501
        %503 = vrot.lane.b32.xlu0 %v471, 110
        %v504 = vpop.permute.xlu0 %503
        %v505 = vsel %vm335, %v500, %v502
        %v506 = vsel %vm335, %v502, %v504
        %v509 = vsel %vm276, %v505, 0.0
        %v510 = vsel %vm277, %v506, 0.0
        %511 = vrot.lane.b32.xlu0 %v467, 96
        %v512 = vpop.permute.xlu0 %511
        %513 = vrot.lane.b32.xlu0 %v468, 96
        %v514 = vpop.permute.xlu0 %513
        %515 = vrot.lane.b32.xlu0 %v471, 96
        %v516 = vpop.permute.xlu0 %515
        %v517 = vsel %vm348, %v512, %v514
        %v518 = vsel %vm348, %v514, %v516
        %v521 = vsel %vm274, %v517, 0.0
        %v522 = vsel %vm275, %v518, 0.0
        %523 = vrot.lane.b32.xlu0 %v467, 94
        %v524 = vpop.permute.xlu0 %523
        %525 = vrot.lane.b32.xlu0 %v468, 94
        %v526 = vpop.permute.xlu0 %525
        %527 = vrot.lane.b32.xlu0 %v471, 94
        %v528 = vpop.permute.xlu0 %527
        %v529 = vsel %vm361, %v524, %v526
        %v530 = vsel %vm361, %v526, %v528
        %v533 = vsel %vm276, %v529, 0.0
        %v534 = vsel %vm277, %v530, 0.0
        %535 = vrot.lane.b32.xlu0 %v467, 127
        %v536 = vpop.permute.xlu0 %535
        %537 = vrot.lane.b32.xlu0 %v468, 127
        %v538 = vpop.permute.xlu0 %537
        %539 = vrot.lane.b32.xlu0 %v471, 127
        %v540 = vpop.permute.xlu0 %539
        %v541 = vsel %vm374, %v536, %v538
        %v542 = vsel %vm374, %v538, %v540
        %545 = vrot.lane.b32.xlu0 %v467, 111
        %v546 = vpop.permute.xlu0 %545
        %547 = vrot.lane.b32.xlu0 %v468, 111
        %v548 = vpop.permute.xlu0 %547
        %549 = vrot.lane.b32.xlu0 %v471, 111
        %v550 = vpop.permute.xlu0 %549
        %v551 = vsel %vm385, %v546, %v548
        %v552 = vsel %vm385, %v548, %v550
        %555 = vrot.lane.b32.xlu0 %v467, 95
        %v556 = vpop.permute.xlu0 %555
        %557 = vrot.lane.b32.xlu0 %v468, 95
        %v558 = vpop.permute.xlu0 %557
        %559 = vrot.lane.b32.xlu0 %v471, 95
        %v560 = vpop.permute.xlu0 %559
        %v561 = vsel %vm396, %v556, %v558
        %v562 = vsel %vm396, %v558, %v560
        %s565 = scalar_lea.vmem %s1, 8
        %v566 = vld [vmem:[%s565] sm:$0xff]
        %s567 = scalar_lea.vmem %s2, 8
        %v568 = vld [vmem:[%s567] sm:$0xff]
        %570 = vset.pattern.permute.xlu0 0
        %571 = vperm.xlu0 %570, %v568
        %v572 = vpop.permute.xlu0 %571
        %v575 = vsel %vm408, %v566, 0
        %577 = vmatpush.msra.mxu0 0.0
        %578 = vmatpush.msra.mxu0 0.0
        %579 = vmatpush.msra.mxu0 0.0
        %580 = vmatpush.msra.mxu0 0.0
        %581 = vmatpush.msra.mxu0 0.0
        %582 = vmatpush.msra.mxu0 0.0
        %583 = vmatpush.msra.mxu0 0.0
        %584 = vmatpush.msra.mxu0 %v533
        %585 = vmatpush.msra.mxu0 %v561
        %586 = vmatpush.msra.mxu0 %v521
        %587 = vmatpush.msra.mxu0 %v509
        %588 = vmatpush.msra.mxu0 %v551
        %589 = vmatpush.msra.mxu0 %v497
        %590 = vmatpush.msra.mxu0 %v485
        %591 = vmatpush.msra.mxu0 %v541
        %592 = vmatpush.msra.mxu0 %v469
        %593 = vmatmul.f32.gmra.mxu0 %v575
        %v594 = vpop.f32.mrf.mxu0
        %v595 = vadd.f32 %v572, %v594
        %596 = vdwg.mxu0
        %597 = vmatpush.msra.mxu0 0.0
        %598 = vmatpush.msra.mxu0 0.0
        %599 = vmatpush.msra.mxu0 0.0
        %600 = vmatpush.msra.mxu0 0.0
        %601 = vmatpush.msra.mxu0 0.0
        %602 = vmatpush.msra.mxu0 0.0
        %603 = vmatpush.msra.mxu0 0.0
        %604 = vmatpush.msra.mxu0 %v534
        %605 = vmatpush.msra.mxu0 %v562
        %606 = vmatpush.msra.mxu0 %v522
        %607 = vmatpush.msra.mxu0 %v510
        %608 = vmatpush.msra.mxu0 %v552
        %609 = vmatpush.msra.mxu0 %v498
        %610 = vmatpush.msra.mxu0 %v486
        %611 = vmatpush.msra.mxu0 %v542
        %612 = vmatpush.msra.mxu0 %v470
        %613 = vmatmul.f32.gmra.mxu0 %v575
        %v614 = vpop.f32.mrf.mxu0
        %v615 = vadd.f32 %v572, %v614
        %616 = vdwg.mxu0
        %v617 = vmax.f32 %v595, 0.0
        %v618 = vmax.f32 %v615, 0.0
        %v619 = vld [vmem:[%s3] sm:$0xf]
        %v620 = vld [vmem:[%s4] sm:$0xf]
        %622 = vset.pattern.permute.xlu0 0
        %623 = vperm.xlu0 %622, %v620
        %v624 = vpop.permute.xlu0 %623
        %vm626 = vcmask 64512
        %v628 = vsel %vm626, %v619, 0
        %630 = vmatpush.msra.mxu0 0.0
        %631 = vmatpush.msra.mxu0 0.0
        %632 = vmatpush.msra.mxu0 0.0
        %633 = vmatpush.msra.mxu0 0.0
        %634 = vmatpush.msra.mxu0 0.0
        %635 = vmatpush.msra.mxu0 0.0
        %636 = vmatpush.msra.mxu0 0.0
        %637 = vmatpush.msra.mxu0 0.0
        %638 = vmatpush.msra.mxu0 0.0
        %639 = vmatpush.msra.mxu0 0.0
        %640 = vmatpush.msra.mxu0 0.0
        %641 = vmatpush.msra.mxu0 0.0
        %642 = vmatpush.msra.mxu0 0.0
        %643 = vmatpush.msra.mxu0 0.0
        %644 = vmatpush.msra.mxu0 0.0
        %645 = vmatpush.msra.mxu0 %v617
        %646 = vmatmul.f32.gmra.mxu0 %v628
        %v647 = vpop.f32.mrf.mxu0
        %v648 = vadd.f32 %v624, %v647
        %649 = vdwg.mxu0
        %650 = vmatpush.msra.mxu0 0.0
        %651 = vmatpush.msra.mxu0 0.0
        %652 = vmatpush.msra.mxu0 0.0
        %653 = vmatpush.msra.mxu0 0.0
        %654 = vmatpush.msra.mxu0 0.0
        %655 = vmatpush.msra.mxu0 0.0
        %656 = vmatpush.msra.mxu0 0.0
        %657 = vmatpush.msra.mxu0 0.0
        %658 = vmatpush.msra.mxu0 0.0
        %659 = vmatpush.msra.mxu0 0.0
        %660 = vmatpush.msra.mxu0 0.0
        %661 = vmatpush.msra.mxu0 0.0
        %662 = vmatpush.msra.mxu0 0.0
        %663 = vmatpush.msra.mxu0 0.0
        %664 = vmatpush.msra.mxu0 0.0
        %665 = vmatpush.msra.mxu0 %v618
        %666 = vmatmul.f32.gmra.mxu0 %v628
        %v667 = vpop.f32.mrf.mxu0
        %v668 = vadd.f32 %v624, %v667
        %669 = vdwg.mxu0
        %v672 = vrot.slane %v668, 4
        %vm673 = vcmask 1043456
        %v674 = vsel %vm673, %v648, %v672
        %676 = vst [vmem:[%s242] sm:$0xff] %v674
        %s677 = sand.u32 %s140, 1
        %s678 = scalar_lea.sflag [#allocation5], %s677
        %s679 = sand.u32 %s140, 1
        %s680 = smul.addr %s679, 8
        %s681 = scalar_lea.vmem [#allocation6], %s680
        // Predicated region
        $region45: #{tpu_custom_call.1} parent=39 // pred_check
          %p682 = pneg %p150
        $region46: #{tpu_custom_call.1} parent=39 // pred_check_branch
          %684 = sbr.rel (%p682) target = $region48
        $region47: #{tpu_custom_call.1} parent=39 // pred_region
          %686 = vsyncadd %s678, 0
          %s687 = smul.addr %s22, 2
          %s688 = smul.addr %s687, 4
          %s689 = scalar_lea.hbm %s5, %s688
          %s691 = sshll.u32 %s681, 4
          %s692 = int_to_ptr.vmem [resolvable:$true] %s691
          %s693 = sshll.u32 %s689, 4
          %s694 = int_to_ptr.hbm [resolvable:$true] %s693
          %696 = dma.vmem_to_hbm [thread:$0]  %s692, 128, %s694, %s678
        $region48: #{tpu_custom_call.1} parent=39 // pred_fallthru
          _
      $region40: #{tpu_custom_call.1} parent=5 // pred_fallthru
        _
      %p697 = scmp.le.s32.totalorder 2, %s17
      // Predicated region
      $region49: #{tpu_custom_call.1} parent=5 // pred_check
        %p698 = pneg %p697
      $region50: #{tpu_custom_call.1} parent=5 // pred_check_branch
        %700 = sbr.rel (%p698) target = $region52
      $region51: #{tpu_custom_call.1} parent=5 // pred_region
        %s701 = ssub.s32 %s17, 2
        // Predicated region
        $region53: #{tpu_custom_call.1} parent=51 // pred_check
          %p702 = pneg %p156
        $region54: #{tpu_custom_call.1} parent=51 // pred_check_branch
          %704 = sbr.rel (%p702) target = $region56
        $region55: #{tpu_custom_call.1} parent=51 // pred_region
          %s705 = sand.u32 %s141, 1
          %s706 = scalar_lea.sflag [#allocation5], %s705
          %s707 = sand.u32 %s141, 1
          %s708 = smul.addr %s707, 8
          %s709 = scalar_lea.vmem [#allocation6], %s708
          %711 = dma.done %s706, 128
        $region56: #{tpu_custom_call.1} parent=51 // pred_fallthru
          _
      $region52: #{tpu_custom_call.1} parent=5 // pred_fallthru
        _
    $region6: #{tpu_custom_call.1} parent=1 // loop_footer
      %s21 = sadd.s32 1, %s17
    $region7: #{tpu_custom_call.1} parent=1 // loop_footer_branch
      %16 = sbr.rel target = $region3
    $region8: #{tpu_custom_call.1} parent=1 // loop_exit
      _
    %712 = vsyncpa [#allocation4], 1
    %s713 = scalar_lea.sflag [#allocation4], 1
    %714 = vsyncpa %s713, 1
    %715 = vsyncpa [#allocation5], 1
    %s716 = scalar_lea.sflag [#allocation5], 1
    %717 = vsyncpa %s716, 1

</llo_original>
